<compile_context>
chip_gen: v5e
topology: v5e:2x2
jax: 0.10.0
libtpu: 0.0.40
codegen_flags: <defaults>
</compile_context>

<pallas_src>
import functools

import jax
import jax.numpy as jnp
import numpy as np
from jax.experimental import pallas as pl
from jax.experimental.pallas import tpu as pltpu

EPS = 1e-5
LANE = 128
SUBLANE = 8


def _round_up(x, m):
    return (x + m - 1) // m * m


# ----------------------------------------------------------------------------
# Kernel
# ----------------------------------------------------------------------------
def _mlp_kernel(x_ref, w_ref, b_ref, o_ref, *, fan_ins, row_offsets, skip_offset,
                skip_fanin, has_skip, out_dim, matmul_dtype):
    """Fused MLP forward on one batch tile.

    x_ref: (TILE_N, d_in_pad)   raw input features
    w_ref: (rows, LANE)         tightly packed BN-folded weights (skip rows at end)
    b_ref: (L, LANE)            BN-folded biases
    o_ref: (TILE_N, out_dim)    narrow output (no lane padding written to HBM)
    """
    num_layers = len(fan_ins)

    def mm(a, b):
        if matmul_dtype is not None:
            a = a.astype(matmul_dtype)
            b = b.astype(matmul_dtype)
        return jnp.dot(a, b, preferred_element_type=jnp.float32)

    x0 = x_ref[...].astype(jnp.float32)                      # (TILE_N, d_in_pad)
    h = x0
    for l in range(num_layers):
        k = fan_ins[l]                                       # static, sublane-rounded
        w = w_ref[pl.ds(row_offsets[l], k), :]               # (k, LANE), static slice
        z = mm(h[:, :k], w) + b_ref[l:l + 1, :]              # (TILE_N, LANE)
        if has_skip and l == num_layers - 1:
            # skip: + pad(x0) @ W_last  ==  + x0 @ W_skip (precomputed rows at the end)
            z = z + mm(x0[:, :skip_fanin], w_ref[pl.ds(skip_offset, skip_fanin), :])
        h = jnp.maximum(z, 0.0) if l < num_layers - 1 else z
    o_ref[...] = h[:, :out_dim].astype(o_ref.dtype)


# ----------------------------------------------------------------------------
# Pure-JAX mirror of the PyTorch forward (reference + BN batch statistics)
# ----------------------------------------------------------------------------
def _forward_and_bn_stats(x, params, has_skip, has_batch_norm):
    """Returns (output, [(mean_l, var_l)] per layer), training-mode BatchNorm."""
    x = x.astype(jnp.float32)
    x0 = x
    num_layers = len(params)
    stats = []

    def add_skip(h):
        pad = h.shape[-1] - x0.shape[-1]
        return h + jnp.pad(x0, ((0, 0), (0, pad)))

    h = x
    for l, (gamma, beta, w, b) in enumerate(params):
        is_last = l == num_layers - 1
        if has_skip and is_last and has_batch_norm:
            h = add_skip(h)                      # skip lands before the last BN
        mean = jnp.mean(h, axis=0)
        var = jnp.mean((h - mean) ** 2, axis=0)  # biased variance (BatchNorm)
        stats.append((mean, var))
        h = (h - mean) * jax.lax.rsqrt(var + EPS) * gamma.astype(jnp.float32) \
            + beta.astype(jnp.float32)
        if has_skip and is_last and not has_batch_norm:
            h = add_skip(h)                      # skip lands before the last Linear
        h = h @ w.astype(jnp.float32).T + b.astype(jnp.float32)
        if not is_last:
            h = jnp.maximum(h, 0.0)
    return h, stats


def _reference_forward(x, params, *, has_skip_connection=True, has_batch_norm=False):
    out, _ = _forward_and_bn_stats(x, params, has_skip_connection, has_batch_norm)
    return out


def _bn_batch_stats(x, params, has_skip, has_batch_norm):
    _, stats = _forward_and_bn_stats(x, params, has_skip, has_batch_norm)
    return stats


# ----------------------------------------------------------------------------
# Parameter folding / packing (runs once in the wrapper, plain XLA)
# ----------------------------------------------------------------------------
def _pack_params(params, bn_stats, d_in, has_skip, has_batch_norm):
    """Fold BN into each Linear and pack everything into two tight, aligned slabs.

      BN(h) @ W + b = h @ (s[:,None]*W) + (t @ W + b),  s = gamma*rsqrt(var+eps),
                                                        t = beta - mean*s
    Skip (added around the last layer) becomes an extra matmul (rows at the end):
      (BN(h)+pad(x0)) @ W = h @ W' + x0 @ W [:d_in]      (has_batch_norm=False)
      BN(h+pad(x0)) @ W   = h @ W' + x0 @ W'[:d_in]      (has_batch_norm=True)
    """
    num_layers = len(params)
    lane = _round_up(max(max(p[2].shape[0] for p in params), LANE), LANE)

    fan_ins = [_round_up(p[2].shape[1], SUBLANE) for p in params]
    row_offsets, off = [], 0
    for k in fan_ins:
        row_offsets.append(off)
        off += k
    skip_fanin = _round_up(d_in, SUBLANE) if has_skip else 0
    skip_offset = off
    total_rows = off + skip_fanin

    w_slab = jnp.zeros((total_rows, lane), jnp.float32)
    b_slab = jnp.zeros((num_layers, lane), jnp.float32)

    for l, ((gamma, beta, w, b), (mean, var)) in enumerate(zip(params, bn_stats)):
        wt = w.astype(jnp.float32).T                              # (d_in_l, d_out_l)
        d_i, d_o = wt.shape
        s = gamma.astype(jnp.float32) * jax.lax.rsqrt(var.astype(jnp.float32) + EPS)
        t = beta.astype(jnp.float32) - mean.astype(jnp.float32) * s
        w_slab = w_slab.at[row_offsets[l]:row_offsets[l] + d_i, :d_o].set(
            wt * s[:, None])
        b_slab = b_slab.at[l, :d_o].set(t @ wt + b.astype(jnp.float32))

    if has_skip:
        gamma, beta, w, b = params[-1]
        mean, var = bn_stats[-1]
        wt = w.astype(jnp.float32).T
        d_o = wt.shape[1]
        if has_batch_norm:
            s = gamma.astype(jnp.float32) * jax.lax.rsqrt(
                var.astype(jnp.float32) + EPS)
            w_skip = wt[:d_in, :] * s[:d_in, None]
        else:
            w_skip = wt[:d_in, :]
        w_slab = w_slab.at[skip_offset:skip_offset + d_in, :d_o].set(w_skip)

    return (w_slab, b_slab, tuple(fan_ins), tuple(row_offsets),
            skip_offset, skip_fanin)


# ----------------------------------------------------------------------------
# Wrapper
# ----------------------------------------------------------------------------
def mlp_forward(x, params, *, has_skip_connection=True, has_batch_norm=False,
                bn_stats=None, tile_n=2048, matmul_dtype=None, out_dtype=None):
    """Fused Pallas forward of the PyTorch MLP.

    params:   list of (gamma, beta, W, b) per layer; W in PyTorch (out, in) layout.
    bn_stats: optional precomputed per-layer (mean, var) (e.g. running stats).
              If None (training-mode BN), the full-batch statistics already require a
              complete forward pass, so that pure-JAX result is returned directly
              instead of re-running the same math in Pallas (review item 2).
    """
    n, d_in = x.shape
    num_layers = len(params)
    out_dim = params[-1][2].shape[0]
    out_dtype = out_dtype or x.dtype

    if bn_stats is None:
        out, _ = _forward_and_bn_stats(x, params, has_skip_connection, has_batch_norm)
        return out.astype(out_dtype)

    (w_slab, b_slab, fan_ins, row_offsets,
     skip_offset, skip_fanin) = _pack_params(params, bn_stats, d_in,
                                             has_skip_connection, has_batch_norm)

    # Pad batch to a tile multiple and features to a sublane multiple
    # (both are no-ops for the documented config with N % tile_n == 0).
    d_in_pad = _round_up(d_in, SUBLANE)
    tile_n = max(SUBLANE, min(_round_up(n, SUBLANE), _round_up(int(tile_n), SUBLANE)))
    n_pad = _round_up(n, tile_n)
    x_p = x
    if d_in_pad != d_in or n_pad != n:
        x_p = jnp.pad(x, ((0, n_pad - n), (0, d_in_pad - d_in)))

    grid = (n_pad // tile_n,)
    kernel = functools.partial(
        _mlp_kernel, fan_ins=fan_ins, row_offsets=row_offsets,
        skip_offset=skip_offset, skip_fanin=skip_fanin,
        has_skip=has_skip_connection, out_dim=out_dim, matmul_dtype=matmul_dtype)

    out = pl.pallas_call(
        kernel,
        out_shape=jax.ShapeDtypeStruct((n_pad, out_dim), out_dtype),
        grid=grid,
        in_specs=[
            pl.BlockSpec((tile_n, d_in_pad), lambda i: (i, 0)),
            # Constant index maps: tiny packed param slabs stay resident in VMEM.
            pl.BlockSpec(w_slab.shape, lambda i: (0, 0)),
            pl.BlockSpec(b_slab.shape, lambda i: (0, 0)),
        ],
        # Narrow output: last dim equals the full array dim (out_dim), so the
        # (8,128) rule is satisfied and no padded lanes hit HBM.
        out_specs=pl.BlockSpec((tile_n, out_dim), lambda i: (i, 0)),
        compiler_params=pltpu.CompilerParams(
            dimension_semantics=("parallel",)),
    )(x_p, w_slab, b_slab)

    return out[:n]


# ----------------------------------------------------------------------------
# Demo / self-check
# ----------------------------------------------------------------------------
if __name__ == "__main__":
    key = jax.random.PRNGKey(0)

    # Small config matching the documented module instantiation.  batch=1024 with
    # tile_n=256 exercises a 4-step batch grid while keeping tensors tiny.
    batch = 1024
    input_dim = 8
    hidden_dims = [32, 16, 8]
    dims = [input_dim] + hidden_dims

    # Deterministic parameter init (PyTorch default Linear init: U(+-1/sqrt(fan_in))).
    params = []
    for i in range(len(dims) - 1):
        key, kw, kb = jax.random.split(key, 3)
        bound = 1.0 / float(np.sqrt(dims[i]))
        w = jax.random.uniform(kw, (dims[i + 1], dims[i]), jnp.float32, -bound, bound)
        b = jax.random.uniform(kb, (dims[i + 1],), jnp.float32, -bound, bound)
        gamma = jnp.ones((dims[i],), jnp.float32)
        beta = jnp.zeros((dims[i],), jnp.float32)
        params.append((gamma, beta, w, b))

    key, kx = jax.random.split(key)
    x = jax.random.normal(kx, (batch, input_dim), jnp.float32)

    # Fused Pallas kernel with precomputed BN statistics (both skip placements).
    for has_bn in (False, True):
        stats = _bn_batch_stats(x, params, True, has_bn)
        out = mlp_forward(x, params, has_skip_connection=True, has_batch_norm=has_bn,
                          bn_stats=stats, tile_n=256)
        jax.block_until_ready(out)
        ref = _reference_forward(x, params, has_skip_connection=True,
                                 has_batch_norm=has_bn)
        np.testing.assert_allclose(np.asarray(out), np.asarray(ref),
                                   rtol=5e-5, atol=1e-5)

    # Training-mode path (bn_stats=None): no redundant Pallas pass, prologue result.
    out_train = mlp_forward(x, params, has_skip_connection=True, has_batch_norm=False)
    jax.block_until_ready(out_train)
    ref_train = _reference_forward(x, params, has_skip_connection=True,
                                   has_batch_norm=False)
    np.testing.assert_allclose(np.asarray(out_train), np.asarray(ref_train),
                               rtol=1e-6, atol=1e-6)

    print("KERNEL_OK")
</pallas_src>

<mosaic_0001>
module attributes {stable_mosaic.version = 11 : i64} {
  func.func @_mlp_kernel(%arg0: i32, %arg1: memref<256x8xf32, #tpu.memory_space<vmem>>, %arg2: memref<64x128xf32, #tpu.memory_space<vmem>>, %arg3: memref<3x128xf32, #tpu.memory_space<vmem>>, %arg4: memref<256x8xf32, #tpu.memory_space<vmem>>) attributes {dimension_semantics = [#tpu.dimension_semantics<parallel>], iteration_bounds = array<i64: 4>, scalar_prefetch = 0 : i64, scratch_operands = 0 : i64, tpu.core_type = #tpu.core_type<tc>, window_params = [{transform_indices = @transform_0, window_bounds = array<i64: 256, 8>}, {pipeline_mode = #tpu.pipeline_mode<synchronous>, transform_indices = @transform_1, window_bounds = array<i64: 64, 128>}, {pipeline_mode = #tpu.pipeline_mode<synchronous>, transform_indices = @transform_2, window_bounds = array<i64: 3, 128>}, {transform_indices = @transform_3, window_bounds = array<i64: 256, 8>}]} {
    %c0 = arith.constant 0 : index
    %c0_0 = arith.constant 0 : index
    %0 = vector.load %arg1[%c0, %c0_0] : memref<256x8xf32, #tpu.memory_space<vmem>>, vector<256x8xf32>
    %c0_1 = arith.constant 0 : index
    %c0_2 = arith.constant 0 : index
    %1 = vector.load %arg2[%c0_1, %c0_2] : memref<64x128xf32, #tpu.memory_space<vmem>>, vector<8x128xf32>
    %cst = arith.constant dense<0.000000e+00> : vector<256x128xf32>
    %2 = tpu.matmul %0, %1, %cst {dimension_numbers = #tpu.dot_dimension_numbers<[1], [0], [0], [1], [0, 0, 1, 1], [], []>} : vector<256x8xf32>, vector<8x128xf32>, vector<256x128xf32> -> vector<256x128xf32>
    %c0_3 = arith.constant 0 : index
    %c0_4 = arith.constant 0 : index
    %3 = vector.load %arg3[%c0_3, %c0_4] : memref<3x128xf32, #tpu.memory_space<vmem>>, vector<1x128xf32>
    %4 = vector.broadcast %3 : vector<1x128xf32> to vector<256x128xf32>
    %5 = arith.addf %2, %4 : vector<256x128xf32>
    %cst_5 = arith.constant 0.000000e+00 : f32
    %6 = vector.broadcast %cst_5 : f32 to vector<256x128xf32>
    %7 = arith.maximumf %5, %6 : vector<256x128xf32>
    %c8 = arith.constant 8 : index
    %c0_6 = arith.constant 0 : index
    %8 = vector.load %arg2[%c8, %c0_6] : memref<64x128xf32, #tpu.memory_space<vmem>>, vector<32x128xf32>
    %9 = vector.extract_strided_slice %7 {offsets = [0, 0], sizes = [256, 32], strides = [1, 1]} : vector<256x128xf32> to vector<256x32xf32>
    %cst_7 = arith.constant dense<0.000000e+00> : vector<256x128xf32>
    %10 = tpu.matmul %9, %8, %cst_7 {dimension_numbers = #tpu.dot_dimension_numbers<[1], [0], [0], [1], [0, 0, 1, 1], [], []>} : vector<256x32xf32>, vector<32x128xf32>, vector<256x128xf32> -> vector<256x128xf32>
    %c1 = arith.constant 1 : index
    %c0_8 = arith.constant 0 : index
    %11 = vector.load %arg3[%c1, %c0_8] : memref<3x128xf32, #tpu.memory_space<vmem>>, vector<1x128xf32>
    %12 = vector.broadcast %11 : vector<1x128xf32> to vector<256x128xf32>
    %13 = arith.addf %10, %12 : vector<256x128xf32>
    %cst_9 = arith.constant 0.000000e+00 : f32
    %14 = vector.broadcast %cst_9 : f32 to vector<256x128xf32>
    %15 = arith.maximumf %13, %14 : vector<256x128xf32>
    %c40 = arith.constant 40 : index
    %c0_10 = arith.constant 0 : index
    %16 = vector.load %arg2[%c40, %c0_10] : memref<64x128xf32, #tpu.memory_space<vmem>>, vector<16x128xf32>
    %17 = vector.extract_strided_slice %15 {offsets = [0, 0], sizes = [256, 16], strides = [1, 1]} : vector<256x128xf32> to vector<256x16xf32>
    %cst_11 = arith.constant dense<0.000000e+00> : vector<256x128xf32>
    %18 = tpu.matmul %17, %16, %cst_11 {dimension_numbers = #tpu.dot_dimension_numbers<[1], [0], [0], [1], [0, 0, 1, 1], [], []>} : vector<256x16xf32>, vector<16x128xf32>, vector<256x128xf32> -> vector<256x128xf32>
    %c2 = arith.constant 2 : index
    %c0_12 = arith.constant 0 : index
    %19 = vector.load %arg3[%c2, %c0_12] : memref<3x128xf32, #tpu.memory_space<vmem>>, vector<1x128xf32>
    %20 = vector.broadcast %19 : vector<1x128xf32> to vector<256x128xf32>
    %21 = arith.addf %18, %20 : vector<256x128xf32>
    %c56 = arith.constant 56 : index
    %c0_13 = arith.constant 0 : index
    %22 = vector.load %arg2[%c56, %c0_13] : memref<64x128xf32, #tpu.memory_space<vmem>>, vector<8x128xf32>
    %cst_14 = arith.constant dense<0.000000e+00> : vector<256x128xf32>
    %23 = tpu.matmul %0, %22, %cst_14 {dimension_numbers = #tpu.dot_dimension_numbers<[1], [0], [0], [1], [0, 0, 1, 1], [], []>} : vector<256x8xf32>, vector<8x128xf32>, vector<256x128xf32> -> vector<256x128xf32>
    %24 = arith.addf %21, %23 : vector<256x128xf32>
    %25 = vector.extract_strided_slice %24 {offsets = [0, 0], sizes = [256, 8], strides = [1, 1]} : vector<256x128xf32> to vector<256x8xf32>
    %c0_15 = arith.constant 0 : index
    %c0_16 = arith.constant 0 : index
    %26 = vector.load %arg4[%c0_15, %c0_16] : memref<256x8xf32, #tpu.memory_space<vmem>>, vector<256x8xf32>
    tpu.vector_store %arg4[%c0_15, %c0_16], %25 {strides = array<i32>} : memref<256x8xf32, #tpu.memory_space<vmem>>, vector<256x8xf32>,
    return
  }
  func.func @transform_0(%arg0: i32) -> (i32, i32) {
    %c0_i32 = arith.constant 0 : i32
    %c0_i32_0 = arith.constant 0 : i32
    return %arg0, %c0_i32 : i32, i32
  }
  func.func @transform_1(%arg0: i32) -> (i32, i32) {
    %c0_i32 = arith.constant 0 : i32
    %c0_i32_0 = arith.constant 0 : i32
    %c0_i32_1 = arith.constant 0 : i32
    return %c0_i32, %c0_i32_0 : i32, i32
  }
  func.func @transform_2(%arg0: i32) -> (i32, i32) {
    %c0_i32 = arith.constant 0 : i32
    %c0_i32_0 = arith.constant 0 : i32
    %c0_i32_1 = arith.constant 0 : i32
    return %c0_i32, %c0_i32_0 : i32, i32
  }
  func.func @transform_3(%arg0: i32) -> (i32, i32) {
    %c0_i32 = arith.constant 0 : i32
    %c0_i32_0 = arith.constant 0 : i32
    return %arg0, %c0_i32 : i32, i32
  }
}

</mosaic_0001>

<llo_original>
// kernel: tpu_custom_call.1
$region0: #{tpu_custom_call.1}
  #allocation0 [shape = 'u32[]', space=smem, size = 0x4, offset = 0x4, fixed_abs, tag = 'smem constant byte address 0x4 - core index']
  #allocation1 [shape = 'u32[72,128]{1,0:T(1,128)}', space=vmem, size = 0x9000, scoped, tag = 'internal scratch']
  %s0 = inlined_call_operand.vmem [shape: f32[1024,8], index: 0, kind: input, shape index: {}]
  %s1 = inlined_call_operand.vmem [shape: f32[64,128], index: 1, kind: input, shape index: {}]
  %s2 = inlined_call_operand.vmem [shape: f32[3,128], index: 2, kind: input, shape index: {}]
  %s3 = inlined_call_operand.vmem [shape: f32[1024,8], index: 3, kind: output, shape index: {}]
  %s4 = sld [smem:[#allocation0]]
  $region45: #{tpu_custom_call.1} parent=0
    _
  %s6 = ssub.s32 1, %s4
  %s7 = scalar_select 0, %s6, %s4
  loop: start=0, step=1, limit=6
  $region2: #{tpu_custom_call.1} parent=0 // loop_pre_header
    _
  $region3: #{tpu_custom_call.1} parent=0 // loop_header
    %s9 = sphi 0, %s13
    %p10 = scmp.ge.s32.totalorder %s9, 6
    %s19 = sphi 0, %s21
    %s22 = sphi 0, %s19
    %s23 = sphi 0, %s22
    %s39 = sphi 0, %s23
    %s43 = sphi 0, %s43
    %s45 = sphi 0, %s43
    %s46 = sphi 0, %s45
    %s60 = sphi 0, %s46
    %s64 = sphi 0, %s64
    %s66 = sphi 0, %s64
    %s67 = sphi 0, %s66
    %s81 = sphi 0, %s67
    %s87 = sphi 0, %s89
    %s90 = sphi 0, %s87
    %s91 = sphi 0, %s90
    %s107 = sphi 0, %s91
  $region4: #{tpu_custom_call.1} parent=0 // loop_header_branch
    %12 = sbr.rel (%p10) target = $region8
  $region5: #{tpu_custom_call.1} parent=0 // loop_body
    %s14 = ssub.s32 %s9, 1
    %s15 = ssub.s32 %s9, 2
    %s16 = sadd.s32 %s9, 1
    %s17 = ssub.s32 %s9, %s16
    %p18 = scmp.eq.s32.totalorder %s17, 0
    %s20 = sadd.s32 %s19, 1
    %s21 = scalar_select %p18, %s19, %s20
    %p24 = pneg %p18
    %p25 = scmp.eq.s32.totalorder %s9, 3
    %p26 = por %p24, %p25
    %p27 = scmp.ne.s32.totalorder %s19, %s22
    %p28 = scmp.eq.s32.totalorder %s9, 0
    %p29 = por %p27, %p28
    %p30 = scmp.ne.s32.totalorder %s19, %s22
    %p31 = scmp.eq.s32.totalorder %s14, 3
    %p32 = por %p30, %p31
    %p33 = scmp.ne.s32.totalorder %s22, %s23
    %p34 = scmp.eq.s32.totalorder %s14, 0
    %p35 = por %p33, %p34
    %p36 = scmp.ne.s32.totalorder %s22, %s23
    %p37 = scmp.eq.s32.totalorder %s15, 3
    %p38 = por %p36, %p37
    %p40 = scmp.ne.s32.totalorder %s23, %s39
    %p41 = scmp.eq.s32.totalorder %s15, 0
    %p42 = por %p40, %p41
    %s44 = sadd.s32 %s43, 1
    %p47 = scmp.eq.s32.totalorder %s9, 3
    %p48 = scmp.ne.s32.totalorder %s43, %s45
    %p49 = scmp.eq.s32.totalorder %s9, 0
    %p50 = por %p48, %p49
    %p51 = scmp.ne.s32.totalorder %s43, %s45
    %p52 = scmp.eq.s32.totalorder %s14, 3
    %p53 = por %p51, %p52
    %p54 = scmp.ne.s32.totalorder %s45, %s46
    %p55 = scmp.eq.s32.totalorder %s14, 0
    %p56 = por %p54, %p55
    %p57 = scmp.ne.s32.totalorder %s45, %s46
    %p58 = scmp.eq.s32.totalorder %s15, 3
    %p59 = por %p57, %p58
    %p61 = scmp.ne.s32.totalorder %s46, %s60
    %p62 = scmp.eq.s32.totalorder %s15, 0
    %p63 = por %p61, %p62
    %s65 = sadd.s32 %s64, 1
    %p68 = scmp.eq.s32.totalorder %s9, 3
    %p69 = scmp.ne.s32.totalorder %s64, %s66
    %p70 = scmp.eq.s32.totalorder %s9, 0
    %p71 = por %p69, %p70
    %p72 = scmp.ne.s32.totalorder %s64, %s66
    %p73 = scmp.eq.s32.totalorder %s14, 3
    %p74 = por %p72, %p73
    %p75 = scmp.ne.s32.totalorder %s66, %s67
    %p76 = scmp.eq.s32.totalorder %s14, 0
    %p77 = por %p75, %p76
    %p78 = scmp.ne.s32.totalorder %s66, %s67
    %p79 = scmp.eq.s32.totalorder %s15, 3
    %p80 = por %p78, %p79
    %p82 = scmp.ne.s32.totalorder %s67, %s81
    %p83 = scmp.eq.s32.totalorder %s15, 0
    %p84 = por %p82, %p83
    %s85 = ssub.s32 %s9, %s16
    %p86 = scmp.eq.s32.totalorder %s85, 0
    %s88 = sadd.s32 %s87, 1
    %s89 = scalar_select %p86, %s87, %s88
    %p92 = pneg %p86
    %p93 = scmp.eq.s32.totalorder %s9, 3
    %p94 = por %p92, %p93
    %p95 = scmp.ne.s32.totalorder %s87, %s90
    %p96 = scmp.eq.s32.totalorder %s9, 0
    %p97 = por %p95, %p96
    %p98 = scmp.ne.s32.totalorder %s87, %s90
    %p99 = scmp.eq.s32.totalorder %s14, 3
    %p100 = por %p98, %p99
    %p101 = scmp.ne.s32.totalorder %s90, %s91
    %p102 = scmp.eq.s32.totalorder %s14, 0
    %p103 = por %p101, %p102
    %p104 = scmp.ne.s32.totalorder %s90, %s91
    %p105 = scmp.eq.s32.totalorder %s15, 3
    %p106 = por %p104, %p105
    %p108 = scmp.ne.s32.totalorder %s91, %s107
    %p109 = scmp.eq.s32.totalorder %s15, 0
    %p110 = por %p108, %p109
    %p111 = scmp.le.s32.totalorder 1, %s9
    %p112 = scmp.lt.s32.totalorder %s9, 5
    %p113 = pnand %p111, %p112
    %p114 = pneg %p113
    // Predicated region
    $region9: #{tpu_custom_call.1} parent=5 // pred_check
      _
    $region10: #{tpu_custom_call.1} parent=5 // pred_check_branch
      %116 = sbr.rel (%p113) target = $region12
    $region11: #{tpu_custom_call.1} parent=5 // pred_region
      %s117 = ssub.s32 %s9, 1
      // Predicated region
      $region13: #{tpu_custom_call.1} parent=11 // pred_check
        %p118 = pneg %p56
      $region14: #{tpu_custom_call.1} parent=11 // pred_check_branch
        %120 = sbr.rel (%p118) target = $region16
      $region15: #{tpu_custom_call.1} parent=11 // pred_region
        _
      $region16: #{tpu_custom_call.1} parent=11 // pred_fallthru
        _
      // Predicated region
      $region17: #{tpu_custom_call.1} parent=11 // pred_check
        %p121 = pneg %p77
      $region18: #{tpu_custom_call.1} parent=11 // pred_check_branch
        %123 = sbr.rel (%p121) target = $region20
      $region19: #{tpu_custom_call.1} parent=11 // pred_region
        _
      $region20: #{tpu_custom_call.1} parent=11 // pred_fallthru
        _
    $region12: #{tpu_custom_call.1} parent=5 // pred_fallthru
      _
    %p124 = scmp.lt.s32.totalorder %s9, 4
    // Predicated region
    $region21: #{tpu_custom_call.1} parent=5 // pred_check
      %p125 = pneg %p124
    $region22: #{tpu_custom_call.1} parent=5 // pred_check_branch
      %127 = sbr.rel (%p125) target = $region24
    $region23: #{tpu_custom_call.1} parent=5 // pred_region
      // Predicated region
      $region25: #{tpu_custom_call.1} parent=23 // pred_check
        %p128 = pneg %p29
      $region26: #{tpu_custom_call.1} parent=23 // pred_check_branch
        %130 = sbr.rel (%p128) target = $region28
      $region27: #{tpu_custom_call.1} parent=23 // pred_region
        %s131 = smul.u32 32, %s9
        %p132 = scmp.lt.s32.totalorder %s131, 127
        %s133 = scalar_select %p132, %s131, 127
        %s134 = smul.addr %s133, 8
        %s135 = scalar_lea.vmem %s0, %s134
        %s136 = smul.u32 32, %s9
      $region28: #{tpu_custom_call.1} parent=23 // pred_fallthru
        _
    $region24: #{tpu_custom_call.1} parent=5 // pred_fallthru
      _
    %p137 = scmp.le.s32.totalorder 1, %s9
    %p138 = scmp.lt.s32.totalorder %s9, 5
    %p139 = pnand %p137, %p138
    %p140 = pneg %p139
    // Predicated region
    $region29: #{tpu_custom_call.1} parent=5 // pred_check
      _
    $region30: #{tpu_custom_call.1} parent=5 // pred_check_branch
      %142 = sbr.rel (%p139) target = $region32
    $region31: #{tpu_custom_call.1} parent=5 // pred_region
      %s143 = ssub.s32 %s9, 1
      %s144 = smul.u32 32, %s14
      %p145 = scmp.lt.s32.totalorder %s144, 127
      %s146 = scalar_select %p145, %s144, 127
      %s147 = smul.addr %s146, 8
      %s148 = scalar_lea.vmem %s0, %s147
      %p149 = pneg %p35
      %p150 = pneg %p32
      %p151 = pneg %p56
      %p152 = pneg %p53
      %p153 = pneg %p77
      %p154 = pneg %p74
      %p155 = pneg %p103
      %p156 = pneg %p100
      %s157 = smul.u32 32, %s14
      %p158 = scmp.lt.s32.totalorder %s157, 127
      %s159 = scalar_select %p158, %s157, 127
      %s160 = smul.addr %s159, 8
      %s161 = scalar_lea.vmem %s3, %s160
      %s162 = smul.u32 32, %s14
      %p163 = scmp.lt.s32.totalorder %s162, 127
      %s164 = scalar_select %p163, %s162, 127
      %s165 = smul.addr %s164, 8
      %s166 = scalar_lea.vmem %s0, %s165
      %s167 = smul.u32 32, %s14
      %s168 = smul.u32 32, %s14
      %p169 = scmp.lt.s32.totalorder %s168, 127
      %s170 = scalar_select %p169, %s168, 127
      %s171 = smul.addr %s170, 8
      %s172 = scalar_lea.vmem %s3, %s171
      %s173 = smul.u32 32, %s14
      %v174 = vld [vmem:[%s166] sm:$0xff]
      %v175 = vld [vmem:[%s166 + $0x8] sm:$0xff]
      %v176 = vld [vmem:[%s166 + $0x10] sm:$0xff]
      %v177 = vld [vmem:[%s166 + $0x18] sm:$0xff]
      %v178 = vld [vmem:[%s166 + $0x20] sm:$0xff]
      %v179 = vld [vmem:[%s166 + $0x28] sm:$0xff]
      %v180 = vld [vmem:[%s166 + $0x30] sm:$0xff]
      %v181 = vld [vmem:[%s166 + $0x38] sm:$0xff]
      %v182 = vld [vmem:[%s166 + $0x40] sm:$0xff]
      %v183 = vld [vmem:[%s166 + $0x48] sm:$0xff]
      %v184 = vld [vmem:[%s166 + $0x50] sm:$0xff]
      %v185 = vld [vmem:[%s166 + $0x58] sm:$0xff]
      %v186 = vld [vmem:[%s166 + $0x60] sm:$0xff]
      %v187 = vld [vmem:[%s166 + $0x68] sm:$0xff]
      %v188 = vld [vmem:[%s166 + $0x70] sm:$0xff]
      %v189 = vld [vmem:[%s166 + $0x78] sm:$0xff]
      %v190 = vld [vmem:[%s166 + $0x80] sm:$0xff]
      %v191 = vld [vmem:[%s166 + $0x88] sm:$0xff]
      %v192 = vld [vmem:[%s166 + $0x90] sm:$0xff]
      %v193 = vld [vmem:[%s166 + $0x98] sm:$0xff]
      %v194 = vld [vmem:[%s166 + $0xa0] sm:$0xff]
      %v195 = vld [vmem:[%s166 + $0xa8] sm:$0xff]
      %v196 = vld [vmem:[%s166 + $0xb0] sm:$0xff]
      %v197 = vld [vmem:[%s166 + $0xb8] sm:$0xff]
      %v198 = vld [vmem:[%s166 + $0xc0] sm:$0xff]
      %v199 = vld [vmem:[%s166 + $0xc8] sm:$0xff]
      %v200 = vld [vmem:[%s166 + $0xd0] sm:$0xff]
      %v201 = vld [vmem:[%s166 + $0xd8] sm:$0xff]
      %v202 = vld [vmem:[%s166 + $0xe0] sm:$0xff]
      %v203 = vld [vmem:[%s166 + $0xe8] sm:$0xff]
      %v204 = vld [vmem:[%s166 + $0xf0] sm:$0xff]
      %v205 = vld [vmem:[%s166 + $0xf8] sm:$0xff]
      %v206 = vld [vmem:[%s1] sm:$0xff]
      %v207 = vld [vmem:[%s2] sm:$0x1]
      %v208 = vperm.slane %v207, 0
      %vm209 = vcmask 64512
      %v211 = vsel %vm209, %v174, 0
      %v214 = vsel %vm209, %v175, 0
      %v217 = vsel %vm209, %v176, 0
      %v220 = vsel %vm209, %v177, 0
      %v223 = vsel %vm209, %v178, 0
      %v226 = vsel %vm209, %v179, 0
      %v229 = vsel %vm209, %v180, 0
      %v232 = vsel %vm209, %v181, 0
      %v235 = vsel %vm209, %v182, 0
      %v238 = vsel %vm209, %v183, 0
      %v241 = vsel %vm209, %v184, 0
      %v244 = vsel %vm209, %v185, 0
      %v247 = vsel %vm209, %v186, 0
      %v250 = vsel %vm209, %v187, 0
      %v253 = vsel %vm209, %v188, 0
      %v256 = vsel %vm209, %v189, 0
      %v259 = vsel %vm209, %v190, 0
      %v262 = vsel %vm209, %v191, 0
      %v265 = vsel %vm209, %v192, 0
      %v268 = vsel %vm209, %v193, 0
      %v271 = vsel %vm209, %v194, 0
      %v274 = vsel %vm209, %v195, 0
      %v277 = vsel %vm209, %v196, 0
      %v280 = vsel %vm209, %v197, 0
      %v283 = vsel %vm209, %v198, 0
      %v286 = vsel %vm209, %v199, 0
      %v289 = vsel %vm209, %v200, 0
      %v292 = vsel %vm209, %v201, 0
      %v295 = vsel %vm209, %v202, 0
      %v298 = vsel %vm209, %v203, 0
      %v301 = vsel %vm209, %v204, 0
      %v304 = vsel %vm209, %v205, 0
      %306 = vmatpush.msra.mxu0 0.0
      %307 = vmatpush.msra.mxu0 0.0
      %308 = vmatpush.msra.mxu0 0.0
      %309 = vmatpush.msra.mxu0 0.0
      %310 = vmatpush.msra.mxu0 0.0
      %311 = vmatpush.msra.mxu0 0.0
      %312 = vmatpush.msra.mxu0 0.0
      %313 = vmatpush.msra.mxu0 0.0
      %314 = vmatpush.msra.mxu0 0.0
      %315 = vmatpush.msra.mxu0 0.0
      %316 = vmatpush.msra.mxu0 0.0
      %317 = vmatpush.msra.mxu0 0.0
      %318 = vmatpush.msra.mxu0 0.0
      %319 = vmatpush.msra.mxu0 0.0
      %320 = vmatpush.msra.mxu0 0.0
      %321 = vmatpush.msra.mxu0 %v206
      %322 = vmatmul.f32.gmra.mxu0 %v211
      %v323 = vpop.f32.mrf.mxu0
      %v324 = vadd.f32 %v208, %v323
      %325 = vmatmul.f32.gmra.mxu0 %v214
      %v326 = vpop.f32.mrf.mxu0
      %v327 = vadd.f32 %v208, %v326
      %328 = vmatmul.f32.gmra.mxu0 %v217
      %v329 = vpop.f32.mrf.mxu0
      %v330 = vadd.f32 %v208, %v329
      %331 = vmatmul.f32.gmra.mxu0 %v220
      %v332 = vpop.f32.mrf.mxu0
      %v333 = vadd.f32 %v208, %v332
      %334 = vmatmul.f32.gmra.mxu0 %v223
      %v335 = vpop.f32.mrf.mxu0
      %v336 = vadd.f32 %v208, %v335
      %337 = vmatmul.f32.gmra.mxu0 %v226
      %v338 = vpop.f32.mrf.mxu0
      %v339 = vadd.f32 %v208, %v338
      %340 = vmatmul.f32.gmra.mxu0 %v229
      %v341 = vpop.f32.mrf.mxu0
      %v342 = vadd.f32 %v208, %v341
      %343 = vmatmul.f32.gmra.mxu0 %v232
      %v344 = vpop.f32.mrf.mxu0
      %v345 = vadd.f32 %v208, %v344
      %346 = vmatmul.f32.gmra.mxu0 %v235
      %v347 = vpop.f32.mrf.mxu0
      %v348 = vadd.f32 %v208, %v347
      %349 = vmatmul.f32.gmra.mxu0 %v238
      %v350 = vpop.f32.mrf.mxu0
      %v351 = vadd.f32 %v208, %v350
      %352 = vmatmul.f32.gmra.mxu0 %v241
      %v353 = vpop.f32.mrf.mxu0
      %v354 = vadd.f32 %v208, %v353
      %355 = vmatmul.f32.gmra.mxu0 %v244
      %v356 = vpop.f32.mrf.mxu0
      %v357 = vadd.f32 %v208, %v356
      %358 = vmatmul.f32.gmra.mxu0 %v247
      %v359 = vpop.f32.mrf.mxu0
      %v360 = vadd.f32 %v208, %v359
      %361 = vmatmul.f32.gmra.mxu0 %v250
      %v362 = vpop.f32.mrf.mxu0
      %v363 = vadd.f32 %v208, %v362
      %364 = vmatmul.f32.gmra.mxu0 %v253
      %v365 = vpop.f32.mrf.mxu0
      %v366 = vadd.f32 %v208, %v365
      %367 = vmatmul.f32.gmra.mxu0 %v256
      %v368 = vpop.f32.mrf.mxu0
      %v369 = vadd.f32 %v208, %v368
      %370 = vmatmul.f32.gmra.mxu0 %v259
      %v371 = vpop.f32.mrf.mxu0
      %v372 = vadd.f32 %v208, %v371
      %373 = vmatmul.f32.gmra.mxu0 %v262
      %v374 = vpop.f32.mrf.mxu0
      %v375 = vadd.f32 %v208, %v374
      %376 = vmatmul.f32.gmra.mxu0 %v265
      %v377 = vpop.f32.mrf.mxu0
      %v378 = vadd.f32 %v208, %v377
      %379 = vmatmul.f32.gmra.mxu0 %v268
      %v380 = vpop.f32.mrf.mxu0
      %v381 = vadd.f32 %v208, %v380
      %382 = vmatmul.f32.gmra.mxu0 %v271
      %v383 = vpop.f32.mrf.mxu0
      %v384 = vadd.f32 %v208, %v383
      %385 = vmatmul.f32.gmra.mxu0 %v274
      %v386 = vpop.f32.mrf.mxu0
      %v387 = vadd.f32 %v208, %v386
      %388 = vmatmul.f32.gmra.mxu0 %v277
      %v389 = vpop.f32.mrf.mxu0
      %v390 = vadd.f32 %v208, %v389
      %391 = vmatmul.f32.gmra.mxu0 %v280
      %v392 = vpop.f32.mrf.mxu0
      %v393 = vadd.f32 %v208, %v392
      %394 = vmatmul.f32.gmra.mxu0 %v283
      %v395 = vpop.f32.mrf.mxu0
      %v396 = vadd.f32 %v208, %v395
      %397 = vmatmul.f32.gmra.mxu0 %v286
      %v398 = vpop.f32.mrf.mxu0
      %v399 = vadd.f32 %v208, %v398
      %400 = vmatmul.f32.gmra.mxu0 %v289
      %v401 = vpop.f32.mrf.mxu0
      %v402 = vadd.f32 %v208, %v401
      %403 = vmatmul.f32.gmra.mxu0 %v292
      %v404 = vpop.f32.mrf.mxu0
      %v405 = vadd.f32 %v208, %v404
      %406 = vmatmul.f32.gmra.mxu0 %v295
      %v407 = vpop.f32.mrf.mxu0
      %v408 = vadd.f32 %v208, %v407
      %409 = vmatmul.f32.gmra.mxu0 %v298
      %v410 = vpop.f32.mrf.mxu0
      %v411 = vadd.f32 %v208, %v410
      %412 = vmatmul.f32.gmra.mxu0 %v301
      %v413 = vpop.f32.mrf.mxu0
      %v414 = vadd.f32 %v208, %v413
      %415 = vmatmul.f32.gmra.mxu0 %v304
      %v416 = vpop.f32.mrf.mxu0
      %v417 = vadd.f32 %v208, %v416
      %418 = vdwg.mxu0
      %v419 = vmax.f32 %v324, 0.0
      %v420 = vmax.f32 %v327, 0.0
      %v421 = vmax.f32 %v330, 0.0
      %v422 = vmax.f32 %v333, 0.0
      %v423 = vmax.f32 %v336, 0.0
      %v424 = vmax.f32 %v339, 0.0
      %v425 = vmax.f32 %v342, 0.0
      %v426 = vmax.f32 %v345, 0.0
      %v427 = vmax.f32 %v348, 0.0
      %v428 = vmax.f32 %v351, 0.0
      %v429 = vmax.f32 %v354, 0.0
      %v430 = vmax.f32 %v357, 0.0
      %v431 = vmax.f32 %v360, 0.0
      %v432 = vmax.f32 %v363, 0.0
      %v433 = vmax.f32 %v366, 0.0
      %v434 = vmax.f32 %v369, 0.0
      %v435 = vmax.f32 %v372, 0.0
      %v436 = vmax.f32 %v375, 0.0
      %v437 = vmax.f32 %v378, 0.0
      %v438 = vmax.f32 %v381, 0.0
      %v439 = vmax.f32 %v384, 0.0
      %v440 = vmax.f32 %v387, 0.0
      %v441 = vmax.f32 %v390, 0.0
      %v442 = vmax.f32 %v393, 0.0
      %v443 = vmax.f32 %v396, 0.0
      %v444 = vmax.f32 %v399, 0.0
      %v445 = vmax.f32 %v402, 0.0
      %v446 = vmax.f32 %v405, 0.0
      %v447 = vmax.f32 %v408, 0.0
      %v448 = vmax.f32 %v411, 0.0
      %v449 = vmax.f32 %v414, 0.0
      %v450 = vmax.f32 %v417, 0.0
      %v451 = vld [vmem:[%s1 + $0x8] sm:$0xff]
      %v452 = vld [vmem:[%s1 + $0x10] sm:$0xff]
      %v453 = vld [vmem:[%s1 + $0x18] sm:$0xff]
      %v454 = vld [vmem:[%s1 + $0x20] sm:$0xff]
      %v455 = vld [vmem:[%s2 + $0x1] sm:$0x1]
      %v456 = vperm.slane %v455, 0
      %vm457 = vcmask 261120
      %v459 = vsel %vm457, %v419, 0
      %v462 = vsel %vm457, %v420, 0
      %v465 = vsel %vm457, %v421, 0
      %v468 = vsel %vm457, %v422, 0
      %v471 = vsel %vm457, %v423, 0
      %v474 = vsel %vm457, %v424, 0
      %v477 = vsel %vm457, %v425, 0
      %v480 = vsel %vm457, %v426, 0
      %v483 = vsel %vm457, %v427, 0
      %v486 = vsel %vm457, %v428, 0
      %v489 = vsel %vm457, %v429, 0
      %v492 = vsel %vm457, %v430, 0
      %v495 = vsel %vm457, %v431, 0
      %v498 = vsel %vm457, %v432, 0
      %v501 = vsel %vm457, %v433, 0
      %v504 = vsel %vm457, %v434, 0
      %v507 = vsel %vm457, %v435, 0
      %v510 = vsel %vm457, %v436, 0
      %v513 = vsel %vm457, %v437, 0
      %v516 = vsel %vm457, %v438, 0
      %v519 = vsel %vm457, %v439, 0
      %v522 = vsel %vm457, %v440, 0
      %v525 = vsel %vm457, %v441, 0
      %v528 = vsel %vm457, %v442, 0
      %v531 = vsel %vm457, %v443, 0
      %v534 = vsel %vm457, %v444, 0
      %v537 = vsel %vm457, %v445, 0
      %v540 = vsel %vm457, %v446, 0
      %v543 = vsel %vm457, %v447, 0
      %v546 = vsel %vm457, %v448, 0
      %v549 = vsel %vm457, %v449, 0
      %v552 = vsel %vm457, %v450, 0
      %554 = vmatpush.msra.mxu0 0.0
      %555 = vmatpush.msra.mxu0 0.0
      %556 = vmatpush.msra.mxu0 0.0
      %557 = vmatpush.msra.mxu0 0.0
      %558 = vmatpush.msra.mxu0 0.0
      %559 = vmatpush.msra.mxu0 0.0
      %560 = vmatpush.msra.mxu0 0.0
      %561 = vmatpush.msra.mxu0 0.0
      %562 = vmatpush.msra.mxu0 0.0
      %563 = vmatpush.msra.mxu0 0.0
      %564 = vmatpush.msra.mxu0 0.0
      %565 = vmatpush.msra.mxu0 0.0
      %566 = vmatpush.msra.mxu0 %v454
      %567 = vmatpush.msra.mxu0 %v453
      %568 = vmatpush.msra.mxu0 %v452
      %569 = vmatpush.msra.mxu0 %v451
      %570 = vmatmul.f32.gmra.mxu0 %v459
      %v571 = vpop.f32.mrf.mxu0
      %v572 = vadd.f32 %v456, %v571
      %573 = vmatmul.f32.gmra.mxu0 %v462
      %v574 = vpop.f32.mrf.mxu0
      %v575 = vadd.f32 %v456, %v574
      %576 = vmatmul.f32.gmra.mxu0 %v465
      %v577 = vpop.f32.mrf.mxu0
      %v578 = vadd.f32 %v456, %v577
      %579 = vmatmul.f32.gmra.mxu0 %v468
      %v580 = vpop.f32.mrf.mxu0
      %v581 = vadd.f32 %v456, %v580
      %582 = vmatmul.f32.gmra.mxu0 %v471
      %v583 = vpop.f32.mrf.mxu0
      %v584 = vadd.f32 %v456, %v583
      %585 = vmatmul.f32.gmra.mxu0 %v474
      %v586 = vpop.f32.mrf.mxu0
      %v587 = vadd.f32 %v456, %v586
      %588 = vmatmul.f32.gmra.mxu0 %v477
      %v589 = vpop.f32.mrf.mxu0
      %v590 = vadd.f32 %v456, %v589
      %591 = vmatmul.f32.gmra.mxu0 %v480
      %v592 = vpop.f32.mrf.mxu0
      %v593 = vadd.f32 %v456, %v592
      %594 = vmatmul.f32.gmra.mxu0 %v483
      %v595 = vpop.f32.mrf.mxu0
      %v596 = vadd.f32 %v456, %v595
      %597 = vmatmul.f32.gmra.mxu0 %v486
      %v598 = vpop.f32.mrf.mxu0
      %v599 = vadd.f32 %v456, %v598
      %600 = vmatmul.f32.gmra.mxu0 %v489
      %v601 = vpop.f32.mrf.mxu0
      %v602 = vadd.f32 %v456, %v601
      %603 = vmatmul.f32.gmra.mxu0 %v492
      %v604 = vpop.f32.mrf.mxu0
      %v605 = vadd.f32 %v456, %v604
      %606 = vmatmul.f32.gmra.mxu0 %v495
      %v607 = vpop.f32.mrf.mxu0
      %v608 = vadd.f32 %v456, %v607
      %609 = vmatmul.f32.gmra.mxu0 %v498
      %v610 = vpop.f32.mrf.mxu0
      %v611 = vadd.f32 %v456, %v610
      %612 = vmatmul.f32.gmra.mxu0 %v501
      %v613 = vpop.f32.mrf.mxu0
      %v614 = vadd.f32 %v456, %v613
      %615 = vmatmul.f32.gmra.mxu0 %v504
      %v616 = vpop.f32.mrf.mxu0
      %v617 = vadd.f32 %v456, %v616
      %618 = vmatmul.f32.gmra.mxu0 %v507
      %v619 = vpop.f32.mrf.mxu0
      %v620 = vadd.f32 %v456, %v619
      %621 = vmatmul.f32.gmra.mxu0 %v510
      %v622 = vpop.f32.mrf.mxu0
      %v623 = vadd.f32 %v456, %v622
      %624 = vmatmul.f32.gmra.mxu0 %v513
      %v625 = vpop.f32.mrf.mxu0
      %v626 = vadd.f32 %v456, %v625
      %627 = vmatmul.f32.gmra.mxu0 %v516
      %v628 = vpop.f32.mrf.mxu0
      %v629 = vadd.f32 %v456, %v628
      %630 = vmatmul.f32.gmra.mxu0 %v519
      %v631 = vpop.f32.mrf.mxu0
      %v632 = vadd.f32 %v456, %v631
      %633 = vmatmul.f32.gmra.mxu0 %v522
      %v634 = vpop.f32.mrf.mxu0
      %v635 = vadd.f32 %v456, %v634
      %636 = vmatmul.f32.gmra.mxu0 %v525
      %v637 = vpop.f32.mrf.mxu0
      %v638 = vadd.f32 %v456, %v637
      %639 = vmatmul.f32.gmra.mxu0 %v528
      %v640 = vpop.f32.mrf.mxu0
      %v641 = vadd.f32 %v456, %v640
      %642 = vmatmul.f32.gmra.mxu0 %v531
      %v643 = vpop.f32.mrf.mxu0
      %v644 = vadd.f32 %v456, %v643
      %645 = vmatmul.f32.gmra.mxu0 %v534
      %v646 = vpop.f32.mrf.mxu0
      %v647 = vadd.f32 %v456, %v646
      %648 = vmatmul.f32.gmra.mxu0 %v537
      %v649 = vpop.f32.mrf.mxu0
      %v650 = vadd.f32 %v456, %v649
      %651 = vmatmul.f32.gmra.mxu0 %v540
      %v652 = vpop.f32.mrf.mxu0
      %v653 = vadd.f32 %v456, %v652
      %654 = vmatmul.f32.gmra.mxu0 %v543
      %v655 = vpop.f32.mrf.mxu0
      %v656 = vadd.f32 %v456, %v655
      %657 = vmatmul.f32.gmra.mxu0 %v546
      %v658 = vpop.f32.mrf.mxu0
      %v659 = vadd.f32 %v456, %v658
      %660 = vmatmul.f32.gmra.mxu0 %v549
      %v661 = vpop.f32.mrf.mxu0
      %v662 = vadd.f32 %v456, %v661
      %663 = vmatmul.f32.gmra.mxu0 %v552
      %v664 = vpop.f32.mrf.mxu0
      %v665 = vadd.f32 %v456, %v664
      %666 = vdwg.mxu0
      %v667 = vmax.f32 %v572, 0.0
      %v668 = vmax.f32 %v575, 0.0
      %v669 = vmax.f32 %v578, 0.0
      %v670 = vmax.f32 %v581, 0.0
      %v671 = vmax.f32 %v584, 0.0
      %v672 = vmax.f32 %v587, 0.0
      %v673 = vmax.f32 %v590, 0.0
      %v674 = vmax.f32 %v593, 0.0
      %v675 = vmax.f32 %v596, 0.0
      %v676 = vmax.f32 %v599, 0.0
      %v677 = vmax.f32 %v602, 0.0
      %v678 = vmax.f32 %v605, 0.0
      %v679 = vmax.f32 %v608, 0.0
      %v680 = vmax.f32 %v611, 0.0
      %v681 = vmax.f32 %v614, 0.0
      %v682 = vmax.f32 %v617, 0.0
      %v683 = vmax.f32 %v620, 0.0
      %v684 = vmax.f32 %v623, 0.0
      %v685 = vmax.f32 %v626, 0.0
      %v686 = vmax.f32 %v629, 0.0
      %v687 = vmax.f32 %v632, 0.0
      %v688 = vmax.f32 %v635, 0.0
      %v689 = vmax.f32 %v638, 0.0
      %v690 = vmax.f32 %v641, 0.0
      %v691 = vmax.f32 %v644, 0.0
      %v692 = vmax.f32 %v647, 0.0
      %v693 = vmax.f32 %v650, 0.0
      %v694 = vmax.f32 %v653, 0.0
      %v695 = vmax.f32 %v656, 0.0
      %v696 = vmax.f32 %v659, 0.0
      %v697 = vmax.f32 %v662, 0.0
      %v698 = vmax.f32 %v665, 0.0
      %v699 = vld [vmem:[%s1 + $0x28] sm:$0xff]
      %v700 = vld [vmem:[%s1 + $0x30] sm:$0xff]
      %v701 = vld [vmem:[%s2 + $0x2] sm:$0x1]
      %v702 = vperm.slane %v701, 0
      %vm703 = vcmask 130048
      %v705 = vsel %vm703, %v667, 0
      %v708 = vsel %vm703, %v668, 0
      %v711 = vsel %vm703, %v669, 0
      %v714 = vsel %vm703, %v670, 0
      %v717 = vsel %vm703, %v671, 0
      %v720 = vsel %vm703, %v672, 0
      %v723 = vsel %vm703, %v673, 0
      %v726 = vsel %vm703, %v674, 0
      %v729 = vsel %vm703, %v675, 0
      %v732 = vsel %vm703, %v676, 0
      %v735 = vsel %vm703, %v677, 0
      %v738 = vsel %vm703, %v678, 0
      %v741 = vsel %vm703, %v679, 0
      %v744 = vsel %vm703, %v680, 0
      %v747 = vsel %vm703, %v681, 0
      %v750 = vsel %vm703, %v682, 0
      %v753 = vsel %vm703, %v683, 0
      %v756 = vsel %vm703, %v684, 0
      %v759 = vsel %vm703, %v685, 0
      %v762 = vsel %vm703, %v686, 0
      %v765 = vsel %vm703, %v687, 0
      %v768 = vsel %vm703, %v688, 0
      %v771 = vsel %vm703, %v689, 0
      %v774 = vsel %vm703, %v690, 0
      %v777 = vsel %vm703, %v691, 0
      %v780 = vsel %vm703, %v692, 0
      %v783 = vsel %vm703, %v693, 0
      %v786 = vsel %vm703, %v694, 0
      %v789 = vsel %vm703, %v695, 0
      %v792 = vsel %vm703, %v696, 0
      %v795 = vsel %vm703, %v697, 0
      %v798 = vsel %vm703, %v698, 0
      %800 = vmatpush.msra.mxu0 0.0
      %801 = vmatpush.msra.mxu0 0.0
      %802 = vmatpush.msra.mxu0 0.0
      %803 = vmatpush.msra.mxu0 0.0
      %804 = vmatpush.msra.mxu0 0.0
      %805 = vmatpush.msra.mxu0 0.0
      %806 = vmatpush.msra.mxu0 0.0
      %807 = vmatpush.msra.mxu0 0.0
      %808 = vmatpush.msra.mxu0 0.0
      %809 = vmatpush.msra.mxu0 0.0
      %810 = vmatpush.msra.mxu0 0.0
      %811 = vmatpush.msra.mxu0 0.0
      %812 = vmatpush.msra.mxu0 0.0
      %813 = vmatpush.msra.mxu0 0.0
      %814 = vmatpush.msra.mxu0 %v700
      %815 = vmatpush.msra.mxu0 %v699
      %816 = vmatmul.f32.gmra.mxu0 %v705
      %v817 = vpop.f32.mrf.mxu0
      %v818 = vadd.f32 %v702, %v817
      %819 = vmatmul.f32.gmra.mxu0 %v708
      %v820 = vpop.f32.mrf.mxu0
      %v821 = vadd.f32 %v702, %v820
      %822 = vmatmul.f32.gmra.mxu0 %v711
      %v823 = vpop.f32.mrf.mxu0
      %v824 = vadd.f32 %v702, %v823
      %825 = vmatmul.f32.gmra.mxu0 %v714
      %v826 = vpop.f32.mrf.mxu0
      %v827 = vadd.f32 %v702, %v826
      %828 = vmatmul.f32.gmra.mxu0 %v717
      %v829 = vpop.f32.mrf.mxu0
      %v830 = vadd.f32 %v702, %v829
      %831 = vmatmul.f32.gmra.mxu0 %v720
      %v832 = vpop.f32.mrf.mxu0
      %v833 = vadd.f32 %v702, %v832
      %834 = vmatmul.f32.gmra.mxu0 %v723
      %v835 = vpop.f32.mrf.mxu0
      %v836 = vadd.f32 %v702, %v835
      %837 = vmatmul.f32.gmra.mxu0 %v726
      %v838 = vpop.f32.mrf.mxu0
      %v839 = vadd.f32 %v702, %v838
      %840 = vmatmul.f32.gmra.mxu0 %v729
      %v841 = vpop.f32.mrf.mxu0
      %v842 = vadd.f32 %v702, %v841
      %843 = vmatmul.f32.gmra.mxu0 %v732
      %v844 = vpop.f32.mrf.mxu0
      %v845 = vadd.f32 %v702, %v844
      %846 = vmatmul.f32.gmra.mxu0 %v735
      %v847 = vpop.f32.mrf.mxu0
      %v848 = vadd.f32 %v702, %v847
      %849 = vmatmul.f32.gmra.mxu0 %v738
      %v850 = vpop.f32.mrf.mxu0
      %v851 = vadd.f32 %v702, %v850
      %852 = vmatmul.f32.gmra.mxu0 %v741
      %v853 = vpop.f32.mrf.mxu0
      %v854 = vadd.f32 %v702, %v853
      %855 = vmatmul.f32.gmra.mxu0 %v744
      %v856 = vpop.f32.mrf.mxu0
      %v857 = vadd.f32 %v702, %v856
      %858 = vmatmul.f32.gmra.mxu0 %v747
      %v859 = vpop.f32.mrf.mxu0
      %v860 = vadd.f32 %v702, %v859
      %861 = vmatmul.f32.gmra.mxu0 %v750
      %v862 = vpop.f32.mrf.mxu0
      %v863 = vadd.f32 %v702, %v862
      %864 = vmatmul.f32.gmra.mxu0 %v753
      %v865 = vpop.f32.mrf.mxu0
      %v866 = vadd.f32 %v702, %v865
      %867 = vmatmul.f32.gmra.mxu0 %v756
      %v868 = vpop.f32.mrf.mxu0
      %v869 = vadd.f32 %v702, %v868
      %870 = vmatmul.f32.gmra.mxu0 %v759
      %v871 = vpop.f32.mrf.mxu0
      %v872 = vadd.f32 %v702, %v871
      %873 = vmatmul.f32.gmra.mxu0 %v762
      %v874 = vpop.f32.mrf.mxu0
      %v875 = vadd.f32 %v702, %v874
      %876 = vmatmul.f32.gmra.mxu0 %v765
      %v877 = vpop.f32.mrf.mxu0
      %v878 = vadd.f32 %v702, %v877
      %879 = vmatmul.f32.gmra.mxu0 %v768
      %v880 = vpop.f32.mrf.mxu0
      %v881 = vadd.f32 %v702, %v880
      %882 = vmatmul.f32.gmra.mxu0 %v771
      %v883 = vpop.f32.mrf.mxu0
      %v884 = vadd.f32 %v702, %v883
      %885 = vmatmul.f32.gmra.mxu0 %v774
      %v886 = vpop.f32.mrf.mxu0
      %v887 = vadd.f32 %v702, %v886
      %888 = vmatmul.f32.gmra.mxu0 %v777
      %v889 = vpop.f32.mrf.mxu0
      %v890 = vadd.f32 %v702, %v889
      %891 = vmatmul.f32.gmra.mxu0 %v780
      %v892 = vpop.f32.mrf.mxu0
      %v893 = vadd.f32 %v702, %v892
      %894 = vmatmul.f32.gmra.mxu0 %v783
      %v895 = vpop.f32.mrf.mxu0
      %v896 = vadd.f32 %v702, %v895
      %897 = vmatmul.f32.gmra.mxu0 %v786
      %v898 = vpop.f32.mrf.mxu0
      %v899 = vadd.f32 %v702, %v898
      %900 = vmatmul.f32.gmra.mxu0 %v789
      %v901 = vpop.f32.mrf.mxu0
      %v902 = vadd.f32 %v702, %v901
      %903 = vmatmul.f32.gmra.mxu0 %v792
      %v904 = vpop.f32.mrf.mxu0
      %v905 = vadd.f32 %v702, %v904
      %906 = vmatmul.f32.gmra.mxu0 %v795
      %v907 = vpop.f32.mrf.mxu0
      %v908 = vadd.f32 %v702, %v907
      %909 = vmatmul.f32.gmra.mxu0 %v798
      %v910 = vpop.f32.mrf.mxu0
      %v911 = vadd.f32 %v702, %v910
      %912 = vdwg.mxu0
      %v913 = vld [vmem:[%s1 + $0x38] sm:$0xff]
      %914 = vmatpush.msra.mxu0 0.0
      %915 = vmatpush.msra.mxu0 0.0
      %916 = vmatpush.msra.mxu0 0.0
      %917 = vmatpush.msra.mxu0 0.0
      %918 = vmatpush.msra.mxu0 0.0
      %919 = vmatpush.msra.mxu0 0.0
      %920 = vmatpush.msra.mxu0 0.0
      %921 = vmatpush.msra.mxu0 0.0
      %922 = vmatpush.msra.mxu0 0.0
      %923 = vmatpush.msra.mxu0 0.0
      %924 = vmatpush.msra.mxu0 0.0
      %925 = vmatpush.msra.mxu0 0.0
      %926 = vmatpush.msra.mxu0 0.0
      %927 = vmatpush.msra.mxu0 0.0
      %928 = vmatpush.msra.mxu0 0.0
      %929 = vmatpush.msra.mxu0 %v913
      %930 = vmatmul.f32.gmra.mxu0 %v211
      %v931 = vpop.f32.mrf.mxu0
      %v932 = vadd.f32 0.0, %v931
      %933 = vmatmul.f32.gmra.mxu0 %v214
      %v934 = vpop.f32.mrf.mxu0
      %v935 = vadd.f32 0.0, %v934
      %936 = vmatmul.f32.gmra.mxu0 %v217
      %v937 = vpop.f32.mrf.mxu0
      %v938 = vadd.f32 0.0, %v937
      %939 = vmatmul.f32.gmra.mxu0 %v220
      %v940 = vpop.f32.mrf.mxu0
      %v941 = vadd.f32 0.0, %v940
      %942 = vmatmul.f32.gmra.mxu0 %v223
      %v943 = vpop.f32.mrf.mxu0
      %v944 = vadd.f32 0.0, %v943
      %945 = vmatmul.f32.gmra.mxu0 %v226
      %v946 = vpop.f32.mrf.mxu0
      %v947 = vadd.f32 0.0, %v946
      %948 = vmatmul.f32.gmra.mxu0 %v229
      %v949 = vpop.f32.mrf.mxu0
      %v950 = vadd.f32 0.0, %v949
      %951 = vmatmul.f32.gmra.mxu0 %v232
      %v952 = vpop.f32.mrf.mxu0
      %v953 = vadd.f32 0.0, %v952
      %954 = vmatmul.f32.gmra.mxu0 %v235
      %v955 = vpop.f32.mrf.mxu0
      %v956 = vadd.f32 0.0, %v955
      %957 = vmatmul.f32.gmra.mxu0 %v238
      %v958 = vpop.f32.mrf.mxu0
      %v959 = vadd.f32 0.0, %v958
      %960 = vmatmul.f32.gmra.mxu0 %v241
      %v961 = vpop.f32.mrf.mxu0
      %v962 = vadd.f32 0.0, %v961
      %963 = vmatmul.f32.gmra.mxu0 %v244
      %v964 = vpop.f32.mrf.mxu0
      %v965 = vadd.f32 0.0, %v964
      %966 = vmatmul.f32.gmra.mxu0 %v247
      %v967 = vpop.f32.mrf.mxu0
      %v968 = vadd.f32 0.0, %v967
      %969 = vmatmul.f32.gmra.mxu0 %v250
      %v970 = vpop.f32.mrf.mxu0
      %v971 = vadd.f32 0.0, %v970
      %972 = vmatmul.f32.gmra.mxu0 %v253
      %v973 = vpop.f32.mrf.mxu0
      %v974 = vadd.f32 0.0, %v973
      %975 = vmatmul.f32.gmra.mxu0 %v256
      %v976 = vpop.f32.mrf.mxu0
      %v977 = vadd.f32 0.0, %v976
      %978 = vmatmul.f32.gmra.mxu0 %v259
      %v979 = vpop.f32.mrf.mxu0
      %v980 = vadd.f32 0.0, %v979
      %981 = vmatmul.f32.gmra.mxu0 %v262
      %v982 = vpop.f32.mrf.mxu0
      %v983 = vadd.f32 0.0, %v982
      %984 = vmatmul.f32.gmra.mxu0 %v265
      %v985 = vpop.f32.mrf.mxu0
      %v986 = vadd.f32 0.0, %v985
      %987 = vmatmul.f32.gmra.mxu0 %v268
      %v988 = vpop.f32.mrf.mxu0
      %v989 = vadd.f32 0.0, %v988
      %990 = vmatmul.f32.gmra.mxu0 %v271
      %v991 = vpop.f32.mrf.mxu0
      %v992 = vadd.f32 0.0, %v991
      %993 = vmatmul.f32.gmra.mxu0 %v274
      %v994 = vpop.f32.mrf.mxu0
      %v995 = vadd.f32 0.0, %v994
      %996 = vmatmul.f32.gmra.mxu0 %v277
      %v997 = vpop.f32.mrf.mxu0
      %v998 = vadd.f32 0.0, %v997
      %999 = vmatmul.f32.gmra.mxu0 %v280
      %v1000 = vpop.f32.mrf.mxu0
      %v1001 = vadd.f32 0.0, %v1000
      %1002 = vmatmul.f32.gmra.mxu0 %v283
      %v1003 = vpop.f32.mrf.mxu0
      %v1004 = vadd.f32 0.0, %v1003
      %1005 = vmatmul.f32.gmra.mxu0 %v286
      %v1006 = vpop.f32.mrf.mxu0
      %v1007 = vadd.f32 0.0, %v1006
      %1008 = vmatmul.f32.gmra.mxu0 %v289
      %v1009 = vpop.f32.mrf.mxu0
      %v1010 = vadd.f32 0.0, %v1009
      %1011 = vmatmul.f32.gmra.mxu0 %v292
      %v1012 = vpop.f32.mrf.mxu0
      %v1013 = vadd.f32 0.0, %v1012
      %1014 = vmatmul.f32.gmra.mxu0 %v295
      %v1015 = vpop.f32.mrf.mxu0
      %v1016 = vadd.f32 0.0, %v1015
      %1017 = vmatmul.f32.gmra.mxu0 %v298
      %v1018 = vpop.f32.mrf.mxu0
      %v1019 = vadd.f32 0.0, %v1018
      %1020 = vmatmul.f32.gmra.mxu0 %v301
      %v1021 = vpop.f32.mrf.mxu0
      %v1022 = vadd.f32 0.0, %v1021
      %1023 = vmatmul.f32.gmra.mxu0 %v304
      %v1024 = vpop.f32.mrf.mxu0
      %v1025 = vadd.f32 0.0, %v1024
      %1026 = vdwg.mxu0
      %v1027 = vadd.f32 %v818, %v932
      %v1028 = vadd.f32 %v821, %v935
      %v1029 = vadd.f32 %v824, %v938
      %v1030 = vadd.f32 %v827, %v941
      %v1031 = vadd.f32 %v830, %v944
      %v1032 = vadd.f32 %v833, %v947
      %v1033 = vadd.f32 %v836, %v950
      %v1034 = vadd.f32 %v839, %v953
      %v1035 = vadd.f32 %v842, %v956
      %v1036 = vadd.f32 %v845, %v959
      %v1037 = vadd.f32 %v848, %v962
      %v1038 = vadd.f32 %v851, %v965
      %v1039 = vadd.f32 %v854, %v968
      %v1040 = vadd.f32 %v857, %v971
      %v1041 = vadd.f32 %v860, %v974
      %v1042 = vadd.f32 %v863, %v977
      %v1043 = vadd.f32 %v866, %v980
      %v1044 = vadd.f32 %v869, %v983
      %v1045 = vadd.f32 %v872, %v986
      %v1046 = vadd.f32 %v875, %v989
      %v1047 = vadd.f32 %v878, %v992
      %v1048 = vadd.f32 %v881, %v995
      %v1049 = vadd.f32 %v884, %v998
      %v1050 = vadd.f32 %v887, %v1001
      %v1051 = vadd.f32 %v890, %v1004
      %v1052 = vadd.f32 %v893, %v1007
      %v1053 = vadd.f32 %v896, %v1010
      %v1054 = vadd.f32 %v899, %v1013
      %v1055 = vadd.f32 %v902, %v1016
      %v1056 = vadd.f32 %v905, %v1019
      %v1057 = vadd.f32 %v908, %v1022
      %v1058 = vadd.f32 %v911, %v1025
      %1059 = vst.msk [vmem:[%s172] sm:$0xff] %vm209, %v1027
      %1060 = vst.msk [vmem:[%s172 + $0x8] sm:$0xff] %vm209, %v1028
      %1061 = vst.msk [vmem:[%s172 + $0x10] sm:$0xff] %vm209, %v1029
      %1062 = vst.msk [vmem:[%s172 + $0x18] sm:$0xff] %vm209, %v1030
      %1063 = vst.msk [vmem:[%s172 + $0x20] sm:$0xff] %vm209, %v1031
      %1064 = vst.msk [vmem:[%s172 + $0x28] sm:$0xff] %vm209, %v1032
      %1065 = vst.msk [vmem:[%s172 + $0x30] sm:$0xff] %vm209, %v1033
      %1066 = vst.msk [vmem:[%s172 + $0x38] sm:$0xff] %vm209, %v1034
      %1067 = vst.msk [vmem:[%s172 + $0x40] sm:$0xff] %vm209, %v1035
      %1068 = vst.msk [vmem:[%s172 + $0x48] sm:$0xff] %vm209, %v1036
      %1069 = vst.msk [vmem:[%s172 + $0x50] sm:$0xff] %vm209, %v1037
      %1070 = vst.msk [vmem:[%s172 + $0x58] sm:$0xff] %vm209, %v1038
      %1071 = vst.msk [vmem:[%s172 + $0x60] sm:$0xff] %vm209, %v1039
      %1072 = vst.msk [vmem:[%s172 + $0x68] sm:$0xff] %vm209, %v1040
      %1073 = vst.msk [vmem:[%s172 + $0x70] sm:$0xff] %vm209, %v1041
      %1074 = vst.msk [vmem:[%s172 + $0x78] sm:$0xff] %vm209, %v1042
      %1075 = vst.msk [vmem:[%s172 + $0x80] sm:$0xff] %vm209, %v1043
      %1076 = vst.msk [vmem:[%s172 + $0x88] sm:$0xff] %vm209, %v1044
      %1077 = vst.msk [vmem:[%s172 + $0x90] sm:$0xff] %vm209, %v1045
      %1078 = vst.msk [vmem:[%s172 + $0x98] sm:$0xff] %vm209, %v1046
      %1079 = vst.msk [vmem:[%s172 + $0xa0] sm:$0xff] %vm209, %v1047
      %1080 = vst.msk [vmem:[%s172 + $0xa8] sm:$0xff] %vm209, %v1048
      %1081 = vst.msk [vmem:[%s172 + $0xb0] sm:$0xff] %vm209, %v1049
      %1082 = vst.msk [vmem:[%s172 + $0xb8] sm:$0xff] %vm209, %v1050
      %1083 = vst.msk [vmem:[%s172 + $0xc0] sm:$0xff] %vm209, %v1051
      %1084 = vst.msk [vmem:[%s172 + $0xc8] sm:$0xff] %vm209, %v1052
      %1085 = vst.msk [vmem:[%s172 + $0xd0] sm:$0xff] %vm209, %v1053
      %1086 = vst.msk [vmem:[%s172 + $0xd8] sm:$0xff] %vm209, %v1054
      %1087 = vst.msk [vmem:[%s172 + $0xe0] sm:$0xff] %vm209, %v1055
      %1088 = vst.msk [vmem:[%s172 + $0xe8] sm:$0xff] %vm209, %v1056
      %1089 = vst.msk [vmem:[%s172 + $0xf0] sm:$0xff] %vm209, %v1057
      %1090 = vst.msk [vmem:[%s172 + $0xf8] sm:$0xff] %vm209, %v1058
      %s1091 = smul.u32 32, %s14
      %p1092 = scmp.lt.s32.totalorder %s1091, 127
      %s1093 = scalar_select %p1092, %s1091, 127
      %s1094 = smul.addr %s1093, 8
      %s1095 = scalar_lea.vmem %s3, %s1094
      // Predicated region
      $region33: #{tpu_custom_call.1} parent=31 // pred_check
        %p1096 = pneg %p100
      $region34: #{tpu_custom_call.1} parent=31 // pred_check_branch
        %1098 = sbr.rel (%p1096) target = $region36
      $region35: #{tpu_custom_call.1} parent=31 // pred_region
        %s1099 = smul.u32 32, %s14
      $region36: #{tpu_custom_call.1} parent=31 // pred_fallthru
        _
    $region32: #{tpu_custom_call.1} parent=5 // pred_fallthru
      _
    %p1100 = scmp.le.s32.totalorder 2, %s9
    // Predicated region
    $region37: #{tpu_custom_call.1} parent=5 // pred_check
      %p1101 = pneg %p1100
    $region38: #{tpu_custom_call.1} parent=5 // pred_check_branch
      %1103 = sbr.rel (%p1101) target = $region40
    $region39: #{tpu_custom_call.1} parent=5 // pred_region
      %s1104 = ssub.s32 %s9, 2
      // Predicated region
      $region41: #{tpu_custom_call.1} parent=39 // pred_check
        %p1105 = pneg %p106
      $region42: #{tpu_custom_call.1} parent=39 // pred_check_branch
        %1107 = sbr.rel (%p1105) target = $region44
      $region43: #{tpu_custom_call.1} parent=39 // pred_region
        %s1108 = smul.u32 32, %s15
        %p1109 = scmp.lt.s32.totalorder %s1108, 127
        %s1110 = scalar_select %p1109, %s1108, 127
        %s1111 = smul.addr %s1110, 8
        %s1112 = scalar_lea.vmem %s3, %s1111
      $region44: #{tpu_custom_call.1} parent=39 // pred_fallthru
        _
    $region40: #{tpu_custom_call.1} parent=5 // pred_fallthru
      _
  $region6: #{tpu_custom_call.1} parent=0 // loop_footer
    %s13 = sadd.s32 1, %s9
  $region7: #{tpu_custom_call.1} parent=0 // loop_footer_branch
    %8 = sbr.rel target = $region3
  $region8: #{tpu_custom_call.1} parent=0 // loop_exit
    _

</llo_original>
